<compile_context>
chip_gen: v6e
topology: v6e:2x2x1
jax: 0.10.0
libtpu: 0.0.40
codegen_flags: <defaults>
</compile_context>

<pallas_src>
import math
import numpy as np
import jax
import jax.numpy as jnp
from jax.experimental import pallas as pl
from jax.experimental.pallas import tpu as pltpu

N_WIRES = 6
DIM = 2 ** N_WIRES          # 64
AMP_COLS = 4 * N_WIRES      # 24 packed amplitude columns per batch row


# ----------------------------- fib-angle table (same as the torch script) -------------
def cartesian_to_spherical(x, y, z):
    theta = math.acos(z / 1)
    phi = math.atan2(y, x)
    if phi < 0:
        phi += 2 * math.pi
    return [theta, phi]


def fibonacci_sphere(n):
    points = []
    golden = math.pi * (math.sqrt(5.0) - 1.0)
    for i in range(n):
        y = 1 - i / float(n - 1) * 2
        radius = math.sqrt(max(1 - y * y, 0.0))
        t = golden * i
        x = math.cos(t) * radius
        z = math.sin(t) * radius
        points.append((x, y, z))
    return [cartesian_to_spherical(x, y, z) for x, y, z in points]


FIB_ANGLES = np.asarray(fibonacci_sphere(5), dtype=np.float64)   # (5, 2) -> [theta, phi]

# Per-index single-qubit amplitudes for RZ(phi) RY(theta) |0>:
#   amp0 = cos(t/2) e^{-i p/2},  amp1 = sin(t/2) e^{+i p/2}
_ht = FIB_ANGLES[:, 0] * 0.5
_hp = FIB_ANGLES[:, 1] * 0.5
AMP_TABLE = np.stack(
    [
        np.cos(_ht) * np.cos(_hp),    # a0 real
        -np.cos(_ht) * np.sin(_hp),   # a0 imag
        np.sin(_ht) * np.cos(_hp),    # a1 real
        np.sin(_ht) * np.sin(_hp),    # a1 imag
    ],
    axis=1,
).astype(np.float32)                  # (5, 4)


# ----------------------------- constant CNOT ring (permutation matrix) -----------------
def _cnot_full_np(control, target, n=N_WIRES, dtype=np.complex64):
    dim = 2 ** n
    u = np.zeros((dim, dim), dtype=dtype)
    for i in range(dim):
        cbit = (i >> (n - 1 - control)) & 1
        j = i ^ (cbit << (n - 1 - target))
        u[j, i] = 1.0
    return u


_ring = np.eye(DIM, dtype=np.complex64)
for _i in range(N_WIRES):
    _ring = _cnot_full_np(_i, (_i + 1) % N_WIRES) @ _ring
CNOT_RING = _ring                      # (64, 64), applied once per layer before the Rots

Z5_DIAG = (1.0 - 2.0 * (np.arange(DIM) & 1)).astype(np.float32)   # PauliZ on wire 5 (LSB)


# ----------------------------- measurement operator (pure JAX, jit-compatible) ---------
def _rot_gate(phi, theta, omega):
    """qml.Rot(phi, theta, omega) = RZ(omega) RY(theta) RZ(phi) as a 2x2 complex64."""
    c = jnp.cos(theta * 0.5)
    s = jnp.sin(theta * 0.5)
    e_pp = jnp.exp(0.5j * (phi + omega))    # e^{+i(phi+omega)/2}
    e_pm = jnp.exp(0.5j * (phi - omega))    # e^{+i(phi-omega)/2}
    m00 = c * jnp.conj(e_pp)
    m01 = -s * e_pm
    m10 = s * jnp.conj(e_pm)
    m11 = c * e_pp
    return jnp.stack([jnp.stack([m00, m01]), jnp.stack([m10, m11])])


def build_measurement_operator(q_params):
    """Packed (2, 64, 64) f32: [Re(M); Im(M)] for M = U^dagger diag(z5) U (traceable)."""
    q = q_params.astype(jnp.float32)
    ring = jnp.asarray(CNOT_RING)
    u = jnp.eye(DIM, dtype=jnp.complex64)
    n_layers = q_params.shape[0]            # static (2)
    for layer in range(n_layers):
        u = ring @ u                        # CNOT ring first
        for j in range(N_WIRES):            # then Rot on each wire
            g = _rot_gate(q[layer, j, 0], q[layer, j, 1], q[layer, j, 2])
            full = jnp.kron(
                jnp.kron(jnp.eye(2 ** j, dtype=jnp.complex64), g),
                jnp.eye(2 ** (N_WIRES - 1 - j), dtype=jnp.complex64),
            )
            u = full @ u
    z = jnp.asarray(Z5_DIAG)
    m = (jnp.conj(u).T * z) @ u             # U^dagger diag(z) U  (Hermitian)
    mr = jnp.real(m).astype(jnp.float32)    # symmetric
    mi = jnp.imag(m).astype(jnp.float32)    # antisymmetric
    return jnp.stack([mr, mi])              # (2, 64, 64)


# ----------------------------- Pallas kernel ------------------------------------------
def vqc_kernel(amp_ref, m_ref, out_ref):
    amps = amp_ref[...]                      # (tb, 24): wire-major [a0r, a0i, a1r, a1i]

    # Batch-invariant per-wire bit masks, computed once at (1, DIM) and hoisted.
    idx = jax.lax.broadcasted_iota(jnp.int32, (1, DIM), 1)
    masks = [((idx >> (N_WIRES - 1 - w)) & 1) == 0 for w in range(N_WIRES)]

    def wire_amp(w):
        a0r = amps[:, 4 * w + 0:4 * w + 1]   # (tb, 1) static lane slices
        a0i = amps[:, 4 * w + 1:4 * w + 2]
        a1r = amps[:, 4 * w + 2:4 * w + 3]
        a1i = amps[:, 4 * w + 3:4 * w + 4]
        # (1, DIM) mask x (tb, 1) values broadcast to (tb, DIM)
        ar = jnp.where(masks[w], a0r, a1r)
        ai = jnp.where(masks[w], a0i, a1i)
        return ar, ai

    # Prepared state |psi> = kron over wires; wire 0 initializes directly.
    pr, pi = wire_amp(0)
    for w in range(1, N_WIRES):
        ar, ai = wire_amp(w)
        pr, pi = pr * ar - pi * ai, pr * ai + pi * ar

    mr = m_ref[0]                            # (64, 64)  Re(M), symmetric
    mi = m_ref[1]                            # (64, 64)  Im(M), antisymmetric
    yr = jnp.dot(pr, mr, preferred_element_type=jnp.float32)
    yi = jnp.dot(pi, mr, preferred_element_type=jnp.float32)
    zi = jnp.dot(pi, mi, preferred_element_type=jnp.float32)
    # <psi|M|psi> = pr^T Mr pr + pi^T Mr pi + 2 * sum(pr * (pi @ Mi))
    out_ref[...] = jnp.sum(pr * (yr + 2.0 * zi) + pi * yi, axis=1, keepdims=True)


# ----------------------------- wrapper -------------------------------------------------
def _round_up(x, m):
    return ((x + m - 1) // m) * m


def _choose_tile(b, block_b):
    """Batch tile: multiple of 8, <= block_b, and >= 2 grid tiles when the batch allows
    (so dimension_semantics=("parallel",) can use both v7x TensorCores)."""
    padded8 = _round_up(b, 8)
    if padded8 > 8:
        half = _round_up((padded8 + 1) // 2, 8)
        tb = min(block_b, half)
    else:
        tb = min(block_b, padded8)
    return max(tb, 8)


def vqc_forward(batch_item, q_params, block_b=256):
    """batch_item: (B, 6) int indices into the 5-point Fibonacci sphere; q_params: (2, 12, 3)."""
    # Glue: index -> precomputed single-qubit amplitude table (no trig in the kernel).
    amp_tbl = jnp.asarray(AMP_TABLE)                 # (5, 4)
    idx = batch_item.astype(jnp.int32)
    b = idx.shape[0]
    amps = amp_tbl[idx].reshape(b, AMP_COLS)         # (B, 24) packed, wire-major

    tb = _choose_tile(b, block_b)
    padded_b = _round_up(b, tb)
    if padded_b != b:
        amps = jnp.pad(amps, ((0, padded_b - b), (0, 0)))

    # Batch-independent Hermitian operator, built on device (jit/grad friendly).
    m = build_measurement_operator(q_params)         # (2, 64, 64) f32

    out = pl.pallas_call(
        vqc_kernel,
        out_shape=jax.ShapeDtypeStruct((padded_b, 1), jnp.float32),
        grid_spec=pltpu.PrefetchScalarGridSpec(
            num_scalar_prefetch=0,
            grid=(padded_b // tb,),
            in_specs=[
                pl.BlockSpec((tb, AMP_COLS), lambda i: (i, 0)),       # fused amplitudes
                pl.BlockSpec((2, DIM, DIM), lambda i: (0, 0, 0)),     # operator stays resident
            ],
            out_specs=pl.BlockSpec((tb, 1), lambda i: (i, 0)),
        ),
        compiler_params=pltpu.CompilerParams(
            dimension_semantics=("parallel",)),      # batch tiles shard across TCs (v7x)
    )(amps, m)
    return out[:b]


# ----------------------------- numpy reference (full float64 statevector sim) ----------
def _ry(t):
    c, s = math.cos(t / 2), math.sin(t / 2)
    return np.array([[c, -s], [s, c]], dtype=np.complex128)


def _rz(p):
    return np.array([[np.exp(-1j * p / 2), 0.0], [0.0, np.exp(1j * p / 2)]], dtype=np.complex128)


def _rot(phi, theta, omega):
    return _rz(omega) @ _ry(theta) @ _rz(phi)


def _single_qubit_full(g, wire, n=N_WIRES):
    u = np.array([[1.0 + 0j]])
    for w in range(n):
        u = np.kron(u, g if w == wire else np.eye(2, dtype=np.complex128))
    return u


def build_layer_unitary_np(q_params_np):
    u = np.eye(DIM, dtype=np.complex128)
    for layer in range(q_params_np.shape[0]):
        w_mat = q_params_np[layer]
        for i in range(N_WIRES):
            u = _cnot_full_np(i, (i + 1) % N_WIRES, dtype=np.complex128) @ u
        for j in range(N_WIRES):
            u = _single_qubit_full(_rot(w_mat[j, 0], w_mat[j, 1], w_mat[j, 2]), j) @ u
    return u


def reference_forward(batch_np, q_np):
    u = build_layer_unitary_np(q_np)
    z = np.array([1.0 if (i & 1) == 0 else -1.0 for i in range(DIM)])
    outs = []
    for row in batch_np:
        psi = np.array([1.0 + 0j])
        for item in row:
            theta, ph = FIB_ANGLES[int(item)]
            v0 = np.exp(-1j * ph / 2) * math.cos(theta / 2)
            v1 = np.exp(1j * ph / 2) * math.sin(theta / 2)
            psi = np.kron(psi, np.array([v0, v1]))
        final = u @ psi
        outs.append(np.sum((np.abs(final) ** 2) * z))
    return np.asarray(outs, dtype=np.float64).reshape(-1, 1)


if __name__ == "__main__":
    key = jax.random.PRNGKey(0)
    k_param, k_inp = jax.random.split(key)

    # nn.Parameter(0.01 * torch.randn(2, 12, 3)) — deterministic synthetic init
    q_params = 0.01 * jax.random.normal(k_param, (2, 12, 3), dtype=jnp.float32)

    # batch of 8 items, each a vector of 6 indices into the 5-point Fibonacci sphere
    batch_item = jax.random.randint(k_inp, (8, N_WIRES), 0, 5, dtype=jnp.int32)

    fwd = jax.jit(vqc_forward)            # whole forward (operator build + kernel) is jittable
    out = jax.block_until_ready(fwd(batch_item, q_params))

    ref = reference_forward(np.asarray(batch_item), np.asarray(q_params, dtype=np.float64))
    np.testing.assert_allclose(np.asarray(out, dtype=np.float64), ref, atol=2e-4, rtol=2e-4)

    assert out.shape == (8, 1)
    print("KERNEL_OK")
</pallas_src>

<mosaic_0001>
module attributes {stable_mosaic.version = 11 : i64} {
  func.func @vqc_kernel(%arg0: i32, %arg1: memref<8x24xf32, #tpu.memory_space<vmem>>, %arg2: memref<2x64x64xf32, #tpu.memory_space<vmem>>, %arg3: memref<8x1xf32, #tpu.memory_space<vmem>>) attributes {dimension_semantics = [#tpu.dimension_semantics<parallel>], iteration_bounds = array<i64: 1>, scalar_prefetch = 0 : i64, scratch_operands = 0 : i64, tpu.core_type = #tpu.core_type<tc>, window_params = [{transform_indices = @transform_0, window_bounds = array<i64: 8, 24>}, {pipeline_mode = #tpu.pipeline_mode<synchronous>, transform_indices = @transform_1, window_bounds = array<i64: 2, 64, 64>}, {transform_indices = @transform_2, window_bounds = array<i64: 8, 1>}]} {
    %c0 = arith.constant 0 : index
    %c0_0 = arith.constant 0 : index
    %0 = vector.load %arg1[%c0, %c0_0] : memref<8x24xf32, #tpu.memory_space<vmem>>, vector<8x24xf32>
    %1 = tpu.iota {dimensions = array<i32: 1>} : vector<1x64xi32>
    %c5_i32 = arith.constant 5 : i32
    %2 = vector.broadcast %c5_i32 : i32 to vector<1x64xi32>
    %3 = arith.shrsi %1, %2 : vector<1x64xi32>
    %c1_i32 = arith.constant 1 : i32
    %4 = vector.broadcast %c1_i32 : i32 to vector<1x64xi32>
    %5 = arith.andi %3, %4 : vector<1x64xi32>
    %c0_i32 = arith.constant 0 : i32
    %6 = vector.broadcast %c0_i32 : i32 to vector<1x64xi32>
    %7 = arith.cmpi eq, %5, %6 : vector<1x64xi32>
    %c4_i32 = arith.constant 4 : i32
    %8 = vector.broadcast %c4_i32 : i32 to vector<1x64xi32>
    %9 = arith.shrsi %1, %8 : vector<1x64xi32>
    %c1_i32_1 = arith.constant 1 : i32
    %10 = vector.broadcast %c1_i32_1 : i32 to vector<1x64xi32>
    %11 = arith.andi %9, %10 : vector<1x64xi32>
    %c0_i32_2 = arith.constant 0 : i32
    %12 = vector.broadcast %c0_i32_2 : i32 to vector<1x64xi32>
    %13 = arith.cmpi eq, %11, %12 : vector<1x64xi32>
    %c3_i32 = arith.constant 3 : i32
    %14 = vector.broadcast %c3_i32 : i32 to vector<1x64xi32>
    %15 = arith.shrsi %1, %14 : vector<1x64xi32>
    %c1_i32_3 = arith.constant 1 : i32
    %16 = vector.broadcast %c1_i32_3 : i32 to vector<1x64xi32>
    %17 = arith.andi %15, %16 : vector<1x64xi32>
    %c0_i32_4 = arith.constant 0 : i32
    %18 = vector.broadcast %c0_i32_4 : i32 to vector<1x64xi32>
    %19 = arith.cmpi eq, %17, %18 : vector<1x64xi32>
    %c2_i32 = arith.constant 2 : i32
    %20 = vector.broadcast %c2_i32 : i32 to vector<1x64xi32>
    %21 = arith.shrsi %1, %20 : vector<1x64xi32>
    %c1_i32_5 = arith.constant 1 : i32
    %22 = vector.broadcast %c1_i32_5 : i32 to vector<1x64xi32>
    %23 = arith.andi %21, %22 : vector<1x64xi32>
    %c0_i32_6 = arith.constant 0 : i32
    %24 = vector.broadcast %c0_i32_6 : i32 to vector<1x64xi32>
    %25 = arith.cmpi eq, %23, %24 : vector<1x64xi32>
    %c1_i32_7 = arith.constant 1 : i32
    %26 = vector.broadcast %c1_i32_7 : i32 to vector<1x64xi32>
    %27 = arith.shrsi %1, %26 : vector<1x64xi32>
    %c1_i32_8 = arith.constant 1 : i32
    %28 = vector.broadcast %c1_i32_8 : i32 to vector<1x64xi32>
    %29 = arith.andi %27, %28 : vector<1x64xi32>
    %c0_i32_9 = arith.constant 0 : i32
    %30 = vector.broadcast %c0_i32_9 : i32 to vector<1x64xi32>
    %31 = arith.cmpi eq, %29, %30 : vector<1x64xi32>
    %c0_i32_10 = arith.constant 0 : i32
    %32 = vector.broadcast %c0_i32_10 : i32 to vector<1x64xi32>
    %33 = arith.shrsi %1, %32 : vector<1x64xi32>
    %c1_i32_11 = arith.constant 1 : i32
    %34 = vector.broadcast %c1_i32_11 : i32 to vector<1x64xi32>
    %35 = arith.andi %33, %34 : vector<1x64xi32>
    %c0_i32_12 = arith.constant 0 : i32
    %36 = vector.broadcast %c0_i32_12 : i32 to vector<1x64xi32>
    %37 = arith.cmpi eq, %35, %36 : vector<1x64xi32>
    %38 = vector.extract_strided_slice %0 {offsets = [0, 0], sizes = [8, 1], strides = [1, 1]} : vector<8x24xf32> to vector<8x1xf32>
    %39 = vector.extract_strided_slice %0 {offsets = [0, 1], sizes = [8, 1], strides = [1, 1]} : vector<8x24xf32> to vector<8x1xf32>
    %40 = vector.extract_strided_slice %0 {offsets = [0, 2], sizes = [8, 1], strides = [1, 1]} : vector<8x24xf32> to vector<8x1xf32>
    %41 = vector.extract_strided_slice %0 {offsets = [0, 3], sizes = [8, 1], strides = [1, 1]} : vector<8x24xf32> to vector<8x1xf32>
    %42 = vector.shape_cast %7 : vector<1x64xi1> to vector<1x64xi1>
    %43 = vector.broadcast %42 : vector<1x64xi1> to vector<8x64xi1>
    %44 = vector.shape_cast %38 : vector<8x1xf32> to vector<8x1xf32>
    %45 = vector.broadcast %44 : vector<8x1xf32> to vector<8x64xf32>
    %46 = vector.shape_cast %40 : vector<8x1xf32> to vector<8x1xf32>
    %47 = vector.broadcast %46 : vector<8x1xf32> to vector<8x64xf32>
    %48 = arith.select %43, %45, %47 : vector<8x64xi1>, vector<8x64xf32>
    %49 = vector.shape_cast %7 : vector<1x64xi1> to vector<1x64xi1>
    %50 = vector.broadcast %49 : vector<1x64xi1> to vector<8x64xi1>
    %51 = vector.shape_cast %39 : vector<8x1xf32> to vector<8x1xf32>
    %52 = vector.broadcast %51 : vector<8x1xf32> to vector<8x64xf32>
    %53 = vector.shape_cast %41 : vector<8x1xf32> to vector<8x1xf32>
    %54 = vector.broadcast %53 : vector<8x1xf32> to vector<8x64xf32>
    %55 = arith.select %50, %52, %54 : vector<8x64xi1>, vector<8x64xf32>
    %56 = vector.extract_strided_slice %0 {offsets = [0, 4], sizes = [8, 1], strides = [1, 1]} : vector<8x24xf32> to vector<8x1xf32>
    %57 = vector.extract_strided_slice %0 {offsets = [0, 5], sizes = [8, 1], strides = [1, 1]} : vector<8x24xf32> to vector<8x1xf32>
    %58 = vector.extract_strided_slice %0 {offsets = [0, 6], sizes = [8, 1], strides = [1, 1]} : vector<8x24xf32> to vector<8x1xf32>
    %59 = vector.extract_strided_slice %0 {offsets = [0, 7], sizes = [8, 1], strides = [1, 1]} : vector<8x24xf32> to vector<8x1xf32>
    %60 = vector.shape_cast %13 : vector<1x64xi1> to vector<1x64xi1>
    %61 = vector.broadcast %60 : vector<1x64xi1> to vector<8x64xi1>
    %62 = vector.shape_cast %56 : vector<8x1xf32> to vector<8x1xf32>
    %63 = vector.broadcast %62 : vector<8x1xf32> to vector<8x64xf32>
    %64 = vector.shape_cast %58 : vector<8x1xf32> to vector<8x1xf32>
    %65 = vector.broadcast %64 : vector<8x1xf32> to vector<8x64xf32>
    %66 = arith.select %61, %63, %65 : vector<8x64xi1>, vector<8x64xf32>
    %67 = vector.shape_cast %13 : vector<1x64xi1> to vector<1x64xi1>
    %68 = vector.broadcast %67 : vector<1x64xi1> to vector<8x64xi1>
    %69 = vector.shape_cast %57 : vector<8x1xf32> to vector<8x1xf32>
    %70 = vector.broadcast %69 : vector<8x1xf32> to vector<8x64xf32>
    %71 = vector.shape_cast %59 : vector<8x1xf32> to vector<8x1xf32>
    %72 = vector.broadcast %71 : vector<8x1xf32> to vector<8x64xf32>
    %73 = arith.select %68, %70, %72 : vector<8x64xi1>, vector<8x64xf32>
    %74 = arith.mulf %48, %66 : vector<8x64xf32>
    %75 = arith.mulf %55, %73 : vector<8x64xf32>
    %76 = arith.subf %74, %75 : vector<8x64xf32>
    %77 = arith.mulf %48, %73 : vector<8x64xf32>
    %78 = arith.mulf %55, %66 : vector<8x64xf32>
    %79 = arith.addf %77, %78 : vector<8x64xf32>
    %80 = vector.extract_strided_slice %0 {offsets = [0, 8], sizes = [8, 1], strides = [1, 1]} : vector<8x24xf32> to vector<8x1xf32>
    %81 = vector.extract_strided_slice %0 {offsets = [0, 9], sizes = [8, 1], strides = [1, 1]} : vector<8x24xf32> to vector<8x1xf32>
    %82 = vector.extract_strided_slice %0 {offsets = [0, 10], sizes = [8, 1], strides = [1, 1]} : vector<8x24xf32> to vector<8x1xf32>
    %83 = vector.extract_strided_slice %0 {offsets = [0, 11], sizes = [8, 1], strides = [1, 1]} : vector<8x24xf32> to vector<8x1xf32>
    %84 = vector.shape_cast %19 : vector<1x64xi1> to vector<1x64xi1>
    %85 = vector.broadcast %84 : vector<1x64xi1> to vector<8x64xi1>
    %86 = vector.shape_cast %80 : vector<8x1xf32> to vector<8x1xf32>
    %87 = vector.broadcast %86 : vector<8x1xf32> to vector<8x64xf32>
    %88 = vector.shape_cast %82 : vector<8x1xf32> to vector<8x1xf32>
    %89 = vector.broadcast %88 : vector<8x1xf32> to vector<8x64xf32>
    %90 = arith.select %85, %87, %89 : vector<8x64xi1>, vector<8x64xf32>
    %91 = vector.shape_cast %19 : vector<1x64xi1> to vector<1x64xi1>
    %92 = vector.broadcast %91 : vector<1x64xi1> to vector<8x64xi1>
    %93 = vector.shape_cast %81 : vector<8x1xf32> to vector<8x1xf32>
    %94 = vector.broadcast %93 : vector<8x1xf32> to vector<8x64xf32>
    %95 = vector.shape_cast %83 : vector<8x1xf32> to vector<8x1xf32>
    %96 = vector.broadcast %95 : vector<8x1xf32> to vector<8x64xf32>
    %97 = arith.select %92, %94, %96 : vector<8x64xi1>, vector<8x64xf32>
    %98 = arith.mulf %76, %90 : vector<8x64xf32>
    %99 = arith.mulf %79, %97 : vector<8x64xf32>
    %100 = arith.subf %98, %99 : vector<8x64xf32>
    %101 = arith.mulf %76, %97 : vector<8x64xf32>
    %102 = arith.mulf %79, %90 : vector<8x64xf32>
    %103 = arith.addf %101, %102 : vector<8x64xf32>
    %104 = vector.extract_strided_slice %0 {offsets = [0, 12], sizes = [8, 1], strides = [1, 1]} : vector<8x24xf32> to vector<8x1xf32>
    %105 = vector.extract_strided_slice %0 {offsets = [0, 13], sizes = [8, 1], strides = [1, 1]} : vector<8x24xf32> to vector<8x1xf32>
    %106 = vector.extract_strided_slice %0 {offsets = [0, 14], sizes = [8, 1], strides = [1, 1]} : vector<8x24xf32> to vector<8x1xf32>
    %107 = vector.extract_strided_slice %0 {offsets = [0, 15], sizes = [8, 1], strides = [1, 1]} : vector<8x24xf32> to vector<8x1xf32>
    %108 = vector.shape_cast %25 : vector<1x64xi1> to vector<1x64xi1>
    %109 = vector.broadcast %108 : vector<1x64xi1> to vector<8x64xi1>
    %110 = vector.shape_cast %104 : vector<8x1xf32> to vector<8x1xf32>
    %111 = vector.broadcast %110 : vector<8x1xf32> to vector<8x64xf32>
    %112 = vector.shape_cast %106 : vector<8x1xf32> to vector<8x1xf32>
    %113 = vector.broadcast %112 : vector<8x1xf32> to vector<8x64xf32>
    %114 = arith.select %109, %111, %113 : vector<8x64xi1>, vector<8x64xf32>
    %115 = vector.shape_cast %25 : vector<1x64xi1> to vector<1x64xi1>
    %116 = vector.broadcast %115 : vector<1x64xi1> to vector<8x64xi1>
    %117 = vector.shape_cast %105 : vector<8x1xf32> to vector<8x1xf32>
    %118 = vector.broadcast %117 : vector<8x1xf32> to vector<8x64xf32>
    %119 = vector.shape_cast %107 : vector<8x1xf32> to vector<8x1xf32>
    %120 = vector.broadcast %119 : vector<8x1xf32> to vector<8x64xf32>
    %121 = arith.select %116, %118, %120 : vector<8x64xi1>, vector<8x64xf32>
    %122 = arith.mulf %100, %114 : vector<8x64xf32>
    %123 = arith.mulf %103, %121 : vector<8x64xf32>
    %124 = arith.subf %122, %123 : vector<8x64xf32>
    %125 = arith.mulf %100, %121 : vector<8x64xf32>
    %126 = arith.mulf %103, %114 : vector<8x64xf32>
    %127 = arith.addf %125, %126 : vector<8x64xf32>
    %128 = vector.extract_strided_slice %0 {offsets = [0, 16], sizes = [8, 1], strides = [1, 1]} : vector<8x24xf32> to vector<8x1xf32>
    %129 = vector.extract_strided_slice %0 {offsets = [0, 17], sizes = [8, 1], strides = [1, 1]} : vector<8x24xf32> to vector<8x1xf32>
    %130 = vector.extract_strided_slice %0 {offsets = [0, 18], sizes = [8, 1], strides = [1, 1]} : vector<8x24xf32> to vector<8x1xf32>
    %131 = vector.extract_strided_slice %0 {offsets = [0, 19], sizes = [8, 1], strides = [1, 1]} : vector<8x24xf32> to vector<8x1xf32>
    %132 = vector.shape_cast %31 : vector<1x64xi1> to vector<1x64xi1>
    %133 = vector.broadcast %132 : vector<1x64xi1> to vector<8x64xi1>
    %134 = vector.shape_cast %128 : vector<8x1xf32> to vector<8x1xf32>
    %135 = vector.broadcast %134 : vector<8x1xf32> to vector<8x64xf32>
    %136 = vector.shape_cast %130 : vector<8x1xf32> to vector<8x1xf32>
    %137 = vector.broadcast %136 : vector<8x1xf32> to vector<8x64xf32>
    %138 = arith.select %133, %135, %137 : vector<8x64xi1>, vector<8x64xf32>
    %139 = vector.shape_cast %31 : vector<1x64xi1> to vector<1x64xi1>
    %140 = vector.broadcast %139 : vector<1x64xi1> to vector<8x64xi1>
    %141 = vector.shape_cast %129 : vector<8x1xf32> to vector<8x1xf32>
    %142 = vector.broadcast %141 : vector<8x1xf32> to vector<8x64xf32>
    %143 = vector.shape_cast %131 : vector<8x1xf32> to vector<8x1xf32>
    %144 = vector.broadcast %143 : vector<8x1xf32> to vector<8x64xf32>
    %145 = arith.select %140, %142, %144 : vector<8x64xi1>, vector<8x64xf32>
    %146 = arith.mulf %124, %138 : vector<8x64xf32>
    %147 = arith.mulf %127, %145 : vector<8x64xf32>
    %148 = arith.subf %146, %147 : vector<8x64xf32>
    %149 = arith.mulf %124, %145 : vector<8x64xf32>
    %150 = arith.mulf %127, %138 : vector<8x64xf32>
    %151 = arith.addf %149, %150 : vector<8x64xf32>
    %152 = vector.extract_strided_slice %0 {offsets = [0, 20], sizes = [8, 1], strides = [1, 1]} : vector<8x24xf32> to vector<8x1xf32>
    %153 = vector.extract_strided_slice %0 {offsets = [0, 21], sizes = [8, 1], strides = [1, 1]} : vector<8x24xf32> to vector<8x1xf32>
    %154 = vector.extract_strided_slice %0 {offsets = [0, 22], sizes = [8, 1], strides = [1, 1]} : vector<8x24xf32> to vector<8x1xf32>
    %155 = vector.extract_strided_slice %0 {offsets = [0, 23], sizes = [8, 1], strides = [1, 1]} : vector<8x24xf32> to vector<8x1xf32>
    %156 = vector.shape_cast %37 : vector<1x64xi1> to vector<1x64xi1>
    %157 = vector.broadcast %156 : vector<1x64xi1> to vector<8x64xi1>
    %158 = vector.shape_cast %152 : vector<8x1xf32> to vector<8x1xf32>
    %159 = vector.broadcast %158 : vector<8x1xf32> to vector<8x64xf32>
    %160 = vector.shape_cast %154 : vector<8x1xf32> to vector<8x1xf32>
    %161 = vector.broadcast %160 : vector<8x1xf32> to vector<8x64xf32>
    %162 = arith.select %157, %159, %161 : vector<8x64xi1>, vector<8x64xf32>
    %163 = vector.shape_cast %37 : vector<1x64xi1> to vector<1x64xi1>
    %164 = vector.broadcast %163 : vector<1x64xi1> to vector<8x64xi1>
    %165 = vector.shape_cast %153 : vector<8x1xf32> to vector<8x1xf32>
    %166 = vector.broadcast %165 : vector<8x1xf32> to vector<8x64xf32>
    %167 = vector.shape_cast %155 : vector<8x1xf32> to vector<8x1xf32>
    %168 = vector.broadcast %167 : vector<8x1xf32> to vector<8x64xf32>
    %169 = arith.select %164, %166, %168 : vector<8x64xi1>, vector<8x64xf32>
    %170 = arith.mulf %148, %162 : vector<8x64xf32>
    %171 = arith.mulf %151, %169 : vector<8x64xf32>
    %172 = arith.subf %170, %171 : vector<8x64xf32>
    %173 = arith.mulf %148, %169 : vector<8x64xf32>
    %174 = arith.mulf %151, %162 : vector<8x64xf32>
    %175 = arith.addf %173, %174 : vector<8x64xf32>
    %c0_13 = arith.constant 0 : index
    %c0_14 = arith.constant 0 : index
    %c0_15 = arith.constant 0 : index
    %176 = vector.load %arg2[%c0_13, %c0_14, %c0_15] : memref<2x64x64xf32, #tpu.memory_space<vmem>>, vector<1x64x64xf32>
    %177 = vector.shape_cast %176 : vector<1x64x64xf32> to vector<64x64xf32>
    %c1 = arith.constant 1 : index
    %c0_16 = arith.constant 0 : index
    %c0_17 = arith.constant 0 : index
    %178 = vector.load %arg2[%c1, %c0_16, %c0_17] : memref<2x64x64xf32, #tpu.memory_space<vmem>>, vector<1x64x64xf32>
    %179 = vector.shape_cast %178 : vector<1x64x64xf32> to vector<64x64xf32>
    %cst = arith.constant dense<0.000000e+00> : vector<8x64xf32>
    %180 = tpu.matmul %172, %177, %cst {dimension_numbers = #tpu.dot_dimension_numbers<[1], [0], [0], [1], [0, 0, 1, 1], [], []>} : vector<8x64xf32>, vector<64x64xf32>, vector<8x64xf32> -> vector<8x64xf32>
    %cst_18 = arith.constant dense<0.000000e+00> : vector<8x64xf32>
    %181 = tpu.matmul %175, %177, %cst_18 {dimension_numbers = #tpu.dot_dimension_numbers<[1], [0], [0], [1], [0, 0, 1, 1], [], []>} : vector<8x64xf32>, vector<64x64xf32>, vector<8x64xf32> -> vector<8x64xf32>
    %cst_19 = arith.constant dense<0.000000e+00> : vector<8x64xf32>
    %182 = tpu.matmul %175, %179, %cst_19 {dimension_numbers = #tpu.dot_dimension_numbers<[1], [0], [0], [1], [0, 0, 1, 1], [], []>} : vector<8x64xf32>, vector<64x64xf32>, vector<8x64xf32> -> vector<8x64xf32>
    %cst_20 = arith.constant 2.000000e+00 : f32
    %183 = vector.broadcast %cst_20 : f32 to vector<8x64xf32>
    %184 = arith.mulf %183, %182 : vector<8x64xf32>
    %185 = arith.addf %180, %184 : vector<8x64xf32>
    %186 = arith.mulf %172, %185 : vector<8x64xf32>
    %187 = arith.mulf %175, %181 : vector<8x64xf32>
    %188 = arith.addf %186, %187 : vector<8x64xf32>
    %cst_21 = arith.constant dense<0.000000e+00> : vector<8xf32>
    %189 = vector.multi_reduction <add>, %188, %cst_21 [1] : vector<8x64xf32> to vector<8xf32>
    %190 = vector.shape_cast %189 : vector<8xf32> to vector<8x1xf32>
    %c0_22 = arith.constant 0 : index
    %c0_23 = arith.constant 0 : index
    %191 = vector.load %arg3[%c0_22, %c0_23] : memref<8x1xf32, #tpu.memory_space<vmem>>, vector<8x1xf32>
    tpu.vector_store %arg3[%c0_22, %c0_23], %190 {strides = array<i32>} : memref<8x1xf32, #tpu.memory_space<vmem>>, vector<8x1xf32>,
    return
  }
  func.func @transform_0(%arg0: i32) -> (i32, i32) {
    %c0_i32 = arith.constant 0 : i32
    %c0_i32_0 = arith.constant 0 : i32
    return %arg0, %c0_i32 : i32, i32
  }
  func.func @transform_1(%arg0: i32) -> (i32, i32, i32) {
    %c0_i32 = arith.constant 0 : i32
    %c0_i32_0 = arith.constant 0 : i32
    %c0_i32_1 = arith.constant 0 : i32
    %c0_i32_2 = arith.constant 0 : i32
    return %c0_i32, %c0_i32_0, %c0_i32_1 : i32, i32, i32
  }
  func.func @transform_2(%arg0: i32) -> (i32, i32) {
    %c0_i32 = arith.constant 0 : i32
    %c0_i32_0 = arith.constant 0 : i32
    return %arg0, %c0_i32 : i32, i32
  }
}

</mosaic_0001>

<llo_original>
// kernel: vqc_forward.1
$region0: #{vqc_forward.1}
  #allocation0 [shape = 'u32[]', space=smem, size = 0x4, offset = 0x4, fixed_abs, tag = 'smem constant byte address 0x4 - core index']
  #allocation1 [shape = 'u32[144,128]{1,0:T(1,128)}', space=vmem, size = 0x12000, scoped, tag = 'internal scratch']
  %s0 = inlined_call_operand.vmem [shape: f32[8,24], index: 0, kind: input, shape index: {}]
  %s1 = inlined_call_operand.vmem [shape: f32[2,64,64], index: 1, kind: input, shape index: {}]
  %s2 = inlined_call_operand.vmem [shape: f32[8,1], index: 2, kind: output, shape index: {}]
  %s3 = sld [smem:[#allocation0]]
  $region18: #{vqc_forward.1} parent=0
    _
  %s5 = ssub.s32 1, %s3
  %s6 = scalar_select 0, %s5, %s3
  // Predicated region
  $region2: #{vqc_forward.1} parent=0 // pred_check
    _
  $region3: #{vqc_forward.1} parent=0 // pred_check_branch
    %8 = sbr.rel (0) target = $region5
  $region4: #{vqc_forward.1} parent=0 // pred_region
    _
  $region5: #{vqc_forward.1} parent=0 // pred_fallthru
    _
  // Predicated region
  $region6: #{vqc_forward.1} parent=0 // pred_check
    _
  $region7: #{vqc_forward.1} parent=0 // pred_check_branch
    %10 = sbr.rel (0) target = $region9
  $region8: #{vqc_forward.1} parent=0 // pred_region
    _
  $region9: #{vqc_forward.1} parent=0 // pred_fallthru
    _
  %v11 = vld [vmem:[%s0] sm:$0xff]
  %v12 = vlaneseq
  %v13 = vand.u32 %v12, 127
  %v14 = vshra.s32 %v13, 5
  %v15 = vand.u32 %v14, 1
  %vm16 = vcmp.eq.s32.totalorder %v15, 0
  %v17 = vshra.s32 %v13, 4
  %v18 = vand.u32 %v17, 1
  %vm19 = vcmp.eq.s32.totalorder %v18, 0
  %v20 = vshra.s32 %v13, 3
  %v21 = vand.u32 %v20, 1
  %vm22 = vcmp.eq.s32.totalorder %v21, 0
  %v23 = vshra.s32 %v13, 2
  %v24 = vand.u32 %v23, 1
  %vm25 = vcmp.eq.s32.totalorder %v24, 0
  %v26 = vshra.s32 %v13, 1
  %v27 = vand.u32 %v26, 1
  %vm28 = vcmp.eq.s32.totalorder %v27, 0
  %v29 = vand.u32 %v13, 1
  %vm30 = vcmp.eq.s32.totalorder %v29, 0
  %v31 = vsel %vm16, 1, 0
  %vm32 = vcmp.eq.s32.totalorder %v31, 1
  %34 = vset.pattern.permute.xlu0 0
  %35 = vperm.xlu0 %34, %v11
  %v36 = vpop.permute.xlu0 %35
  %38 = vset.pattern.permute.xlu0 2
  %39 = vperm.xlu0 %38, %v11
  %v40 = vpop.permute.xlu0 %39
  %v42 = vsel %vm32, %v36, %v40
  %43 = vset.pattern.permute.xlu0 1
  %44 = vperm.xlu0 %43, %v11
  %v45 = vpop.permute.xlu0 %44
  %47 = vset.pattern.permute.xlu0 3
  %48 = vperm.xlu0 %47, %v11
  %v49 = vpop.permute.xlu0 %48
  %v51 = vsel %vm32, %v45, %v49
  %v52 = vsel %vm19, 1, 0
  %vm53 = vcmp.eq.s32.totalorder %v52, 1
  %54 = vset.pattern.permute.xlu0 4
  %55 = vperm.xlu0 %54, %v11
  %v56 = vpop.permute.xlu0 %55
  %58 = vset.pattern.permute.xlu0 6
  %59 = vperm.xlu0 %58, %v11
  %v60 = vpop.permute.xlu0 %59
  %v62 = vsel %vm53, %v56, %v60
  %63 = vset.pattern.permute.xlu0 5
  %64 = vperm.xlu0 %63, %v11
  %v65 = vpop.permute.xlu0 %64
  %67 = vset.pattern.permute.xlu0 7
  %68 = vperm.xlu0 %67, %v11
  %v69 = vpop.permute.xlu0 %68
  %v71 = vsel %vm53, %v65, %v69
  %v72 = vmul.f32 %v42, %v62
  %v73 = vmul.f32 %v51, %v71
  %v74 = vsub.f32 %v72, %v73
  %v75 = vmul.f32 %v42, %v71
  %v76 = vmul.f32 %v51, %v62
  %v77 = vadd.f32 %v75, %v76
  %v78 = vsel %vm22, 1, 0
  %vm79 = vcmp.eq.s32.totalorder %v78, 1
  %80 = vset.pattern.permute.xlu0 8
  %81 = vperm.xlu0 %80, %v11
  %v82 = vpop.permute.xlu0 %81
  %84 = vset.pattern.permute.xlu0 10
  %85 = vperm.xlu0 %84, %v11
  %v86 = vpop.permute.xlu0 %85
  %v88 = vsel %vm79, %v82, %v86
  %89 = vset.pattern.permute.xlu0 9
  %90 = vperm.xlu0 %89, %v11
  %v91 = vpop.permute.xlu0 %90
  %93 = vset.pattern.permute.xlu0 11
  %94 = vperm.xlu0 %93, %v11
  %v95 = vpop.permute.xlu0 %94
  %v97 = vsel %vm79, %v91, %v95
  %v98 = vmul.f32 %v74, %v88
  %v99 = vmul.f32 %v77, %v97
  %v100 = vsub.f32 %v98, %v99
  %v101 = vmul.f32 %v74, %v97
  %v102 = vmul.f32 %v77, %v88
  %v103 = vadd.f32 %v101, %v102
  %v104 = vsel %vm25, 1, 0
  %vm105 = vcmp.eq.s32.totalorder %v104, 1
  %106 = vset.pattern.permute.xlu0 12
  %107 = vperm.xlu0 %106, %v11
  %v108 = vpop.permute.xlu0 %107
  %110 = vset.pattern.permute.xlu0 14
  %111 = vperm.xlu0 %110, %v11
  %v112 = vpop.permute.xlu0 %111
  %v114 = vsel %vm105, %v108, %v112
  %115 = vset.pattern.permute.xlu0 13
  %116 = vperm.xlu0 %115, %v11
  %v117 = vpop.permute.xlu0 %116
  %119 = vset.pattern.permute.xlu0 15
  %120 = vperm.xlu0 %119, %v11
  %v121 = vpop.permute.xlu0 %120
  %v123 = vsel %vm105, %v117, %v121
  %v124 = vmul.f32 %v100, %v114
  %v125 = vmul.f32 %v103, %v123
  %v126 = vsub.f32 %v124, %v125
  %v127 = vmul.f32 %v100, %v123
  %v128 = vmul.f32 %v103, %v114
  %v129 = vadd.f32 %v127, %v128
  %v130 = vsel %vm28, 1, 0
  %vm131 = vcmp.eq.s32.totalorder %v130, 1
  %132 = vset.pattern.permute.xlu0 16
  %133 = vperm.xlu0 %132, %v11
  %v134 = vpop.permute.xlu0 %133
  %136 = vset.pattern.permute.xlu0 18
  %137 = vperm.xlu0 %136, %v11
  %v138 = vpop.permute.xlu0 %137
  %v140 = vsel %vm131, %v134, %v138
  %141 = vset.pattern.permute.xlu0 17
  %142 = vperm.xlu0 %141, %v11
  %v143 = vpop.permute.xlu0 %142
  %145 = vset.pattern.permute.xlu0 19
  %146 = vperm.xlu0 %145, %v11
  %v147 = vpop.permute.xlu0 %146
  %v149 = vsel %vm131, %v143, %v147
  %v150 = vmul.f32 %v126, %v140
  %v151 = vmul.f32 %v129, %v149
  %v152 = vsub.f32 %v150, %v151
  %v153 = vmul.f32 %v126, %v149
  %v154 = vmul.f32 %v129, %v140
  %v155 = vadd.f32 %v153, %v154
  %v156 = vsel %vm30, 1, 0
  %vm157 = vcmp.eq.s32.totalorder %v156, 1
  %158 = vset.pattern.permute.xlu0 20
  %159 = vperm.xlu0 %158, %v11
  %v160 = vpop.permute.xlu0 %159
  %162 = vset.pattern.permute.xlu0 22
  %163 = vperm.xlu0 %162, %v11
  %v164 = vpop.permute.xlu0 %163
  %v166 = vsel %vm157, %v160, %v164
  %167 = vset.pattern.permute.xlu0 21
  %168 = vperm.xlu0 %167, %v11
  %v169 = vpop.permute.xlu0 %168
  %171 = vset.pattern.permute.xlu0 23
  %172 = vperm.xlu0 %171, %v11
  %v173 = vpop.permute.xlu0 %172
  %v175 = vsel %vm157, %v169, %v173
  %v176 = vmul.f32 %v152, %v166
  %v177 = vmul.f32 %v155, %v175
  %v178 = vsub.f32 %v176, %v177
  %v179 = vmul.f32 %v152, %v175
  %v180 = vmul.f32 %v155, %v166
  %v181 = vadd.f32 %v179, %v180
  %v182 = vld [vmem:[%s1] sm:$0xff]
  %v183 = vld [vmem:[%s1 + $0x8] sm:$0xff]
  %v184 = vld [vmem:[%s1 + $0x10] sm:$0xff]
  %v185 = vld [vmem:[%s1 + $0x18] sm:$0xff]
  %v186 = vld [vmem:[%s1 + $0x20] sm:$0xff]
  %v187 = vld [vmem:[%s1 + $0x28] sm:$0xff]
  %v188 = vld [vmem:[%s1 + $0x30] sm:$0xff]
  %v189 = vld [vmem:[%s1 + $0x38] sm:$0xff]
  %s190 = scalar_lea.vmem %s1, 64
  %v191 = vld [vmem:[%s190] sm:$0xff]
  %v192 = vld [vmem:[%s190 + $0x8] sm:$0xff]
  %v193 = vld [vmem:[%s190 + $0x10] sm:$0xff]
  %v194 = vld [vmem:[%s190 + $0x18] sm:$0xff]
  %v195 = vld [vmem:[%s190 + $0x20] sm:$0xff]
  %v196 = vld [vmem:[%s190 + $0x28] sm:$0xff]
  %v197 = vld [vmem:[%s190 + $0x30] sm:$0xff]
  %v198 = vld [vmem:[%s190 + $0x38] sm:$0xff]
  %vm199 = vcmask 523264
  %v201 = vsel %vm199, %v181, 0
  %203 = vmatprep.subr.mxu0 0.0
  %204 = vmatpush1.msra.mxu0 0.0
  %205 = vmatprep.subr.mxu0 0.0
  %206 = vmatpush1.msra.mxu0 0.0
  %207 = vmatprep.subr.mxu0 0.0
  %208 = vmatpush1.msra.mxu0 0.0
  %209 = vmatprep.subr.mxu0 0.0
  %210 = vmatpush1.msra.mxu0 0.0
  %211 = vmatprep.subr.mxu0 0.0
  %212 = vmatpush1.msra.mxu0 0.0
  %213 = vmatprep.subr.mxu0 0.0
  %214 = vmatpush1.msra.mxu0 0.0
  %215 = vmatprep.subr.mxu0 0.0
  %216 = vmatpush1.msra.mxu0 0.0
  %217 = vmatprep.subr.mxu0 0.0
  %218 = vmatpush1.msra.mxu0 0.0
  %219 = vmatprep.subr.mxu0 0.0
  %220 = vmatpush1.msra.mxu0 %v189
  %221 = vmatprep.subr.mxu0 0.0
  %222 = vmatpush1.msra.mxu0 %v188
  %223 = vmatprep.subr.mxu0 0.0
  %224 = vmatpush1.msra.mxu0 %v187
  %225 = vmatprep.subr.mxu0 0.0
  %226 = vmatpush1.msra.mxu0 %v186
  %227 = vmatprep.subr.mxu0 0.0
  %228 = vmatpush1.msra.mxu0 %v185
  %229 = vmatprep.subr.mxu0 0.0
  %230 = vmatpush1.msra.mxu0 %v184
  %231 = vmatprep.subr.mxu0 0.0
  %232 = vmatpush1.msra.mxu0 %v183
  %233 = vmatprep.subr.mxu0 0.0
  %234 = vmatpush1.msra.mxu0 %v182
  %235 = vmatprep.subr.mxu0 0.0
  %236 = vmatpush2.msra.mxu0 0.0
  %237 = vmatprep.subr.mxu0 0.0
  %238 = vmatpush2.msra.mxu0 0.0
  %239 = vmatprep.subr.mxu0 0.0
  %240 = vmatpush2.msra.mxu0 0.0
  %241 = vmatprep.subr.mxu0 0.0
  %242 = vmatpush2.msra.mxu0 0.0
  %243 = vmatprep.subr.mxu0 0.0
  %244 = vmatpush2.msra.mxu0 0.0
  %245 = vmatprep.subr.mxu0 0.0
  %246 = vmatpush2.msra.mxu0 0.0
  %247 = vmatprep.subr.mxu0 0.0
  %248 = vmatpush2.msra.mxu0 0.0
  %249 = vmatprep.subr.mxu0 0.0
  %250 = vmatpush2.msra.mxu0 0.0
  %251 = vmatprep.subr.mxu0 0.0
  %252 = vmatpush2.msra.mxu0 0.0
  %253 = vmatprep.subr.mxu0 0.0
  %254 = vmatpush2.msra.mxu0 0.0
  %255 = vmatprep.subr.mxu0 0.0
  %256 = vmatpush2.msra.mxu0 0.0
  %257 = vmatprep.subr.mxu0 0.0
  %258 = vmatpush2.msra.mxu0 0.0
  %259 = vmatprep.subr.mxu0 0.0
  %260 = vmatpush2.msra.mxu0 0.0
  %261 = vmatprep.subr.mxu0 0.0
  %262 = vmatpush2.msra.mxu0 0.0
  %263 = vmatprep.subr.mxu0 0.0
  %264 = vmatpush2.msra.mxu0 0.0
  %265 = vmatprep.subr.mxu0 0.0
  %266 = vmatpush2.msra.mxu0 0.0
  %267 = vmatprep.mubr.f32.mxu0 0.0
  %268 = vmatmul.mubr.f32.gmra.mxu0 %v201
  %v269 = vpop.f32.mrf.mxu0
  %v270 = vadd.f32 0.0, %v269
  %v271 = vpop.f32.mrf.mxu0
  %272 = vdwg.mxu0
  %273 = vmatprep.subr.mxu0 0.0
  %274 = vmatpush1.msra.mxu0 0.0
  %275 = vmatprep.subr.mxu0 0.0
  %276 = vmatpush1.msra.mxu0 0.0
  %277 = vmatprep.subr.mxu0 0.0
  %278 = vmatpush1.msra.mxu0 0.0
  %279 = vmatprep.subr.mxu0 0.0
  %280 = vmatpush1.msra.mxu0 0.0
  %281 = vmatprep.subr.mxu0 0.0
  %282 = vmatpush1.msra.mxu0 0.0
  %283 = vmatprep.subr.mxu0 0.0
  %284 = vmatpush1.msra.mxu0 0.0
  %285 = vmatprep.subr.mxu0 0.0
  %286 = vmatpush1.msra.mxu0 0.0
  %287 = vmatprep.subr.mxu0 0.0
  %288 = vmatpush1.msra.mxu0 0.0
  %289 = vmatprep.subr.mxu0 0.0
  %290 = vmatpush1.msra.mxu0 %v198
  %291 = vmatprep.subr.mxu0 0.0
  %292 = vmatpush1.msra.mxu0 %v197
  %293 = vmatprep.subr.mxu0 0.0
  %294 = vmatpush1.msra.mxu0 %v196
  %295 = vmatprep.subr.mxu0 0.0
  %296 = vmatpush1.msra.mxu0 %v195
  %297 = vmatprep.subr.mxu0 0.0
  %298 = vmatpush1.msra.mxu0 %v194
  %299 = vmatprep.subr.mxu0 0.0
  %300 = vmatpush1.msra.mxu0 %v193
  %301 = vmatprep.subr.mxu0 0.0
  %302 = vmatpush1.msra.mxu0 %v192
  %303 = vmatprep.subr.mxu0 0.0
  %304 = vmatpush1.msra.mxu0 %v191
  %305 = vmatprep.subr.mxu0 0.0
  %306 = vmatpush2.msra.mxu0 0.0
  %307 = vmatprep.subr.mxu0 0.0
  %308 = vmatpush2.msra.mxu0 0.0
  %309 = vmatprep.subr.mxu0 0.0
  %310 = vmatpush2.msra.mxu0 0.0
  %311 = vmatprep.subr.mxu0 0.0
  %312 = vmatpush2.msra.mxu0 0.0
  %313 = vmatprep.subr.mxu0 0.0
  %314 = vmatpush2.msra.mxu0 0.0
  %315 = vmatprep.subr.mxu0 0.0
  %316 = vmatpush2.msra.mxu0 0.0
  %317 = vmatprep.subr.mxu0 0.0
  %318 = vmatpush2.msra.mxu0 0.0
  %319 = vmatprep.subr.mxu0 0.0
  %320 = vmatpush2.msra.mxu0 0.0
  %321 = vmatprep.subr.mxu0 0.0
  %322 = vmatpush2.msra.mxu0 0.0
  %323 = vmatprep.subr.mxu0 0.0
  %324 = vmatpush2.msra.mxu0 0.0
  %325 = vmatprep.subr.mxu0 0.0
  %326 = vmatpush2.msra.mxu0 0.0
  %327 = vmatprep.subr.mxu0 0.0
  %328 = vmatpush2.msra.mxu0 0.0
  %329 = vmatprep.subr.mxu0 0.0
  %330 = vmatpush2.msra.mxu0 0.0
  %331 = vmatprep.subr.mxu0 0.0
  %332 = vmatpush2.msra.mxu0 0.0
  %333 = vmatprep.subr.mxu0 0.0
  %334 = vmatpush2.msra.mxu0 0.0
  %335 = vmatprep.subr.mxu0 0.0
  %336 = vmatpush2.msra.mxu0 0.0
  %337 = vmatprep.mubr.f32.mxu0 0.0
  %338 = vmatmul.mubr.f32.gmra.mxu0 %v201
  %v339 = vpop.f32.mrf.mxu0
  %v340 = vadd.f32 0.0, %v339
  %v341 = vpop.f32.mrf.mxu0
  %342 = vdwg.mxu0
  %v343 = vmul.f32 %v340, 2.0
  %v345 = vsel %vm199, %v178, 0
  %347 = vmatprep.subr.mxu0 0.0
  %348 = vmatpush1.msra.mxu0 0.0
  %349 = vmatprep.subr.mxu0 0.0
  %350 = vmatpush1.msra.mxu0 0.0
  %351 = vmatprep.subr.mxu0 0.0
  %352 = vmatpush1.msra.mxu0 0.0
  %353 = vmatprep.subr.mxu0 0.0
  %354 = vmatpush1.msra.mxu0 0.0
  %355 = vmatprep.subr.mxu0 0.0
  %356 = vmatpush1.msra.mxu0 0.0
  %357 = vmatprep.subr.mxu0 0.0
  %358 = vmatpush1.msra.mxu0 0.0
  %359 = vmatprep.subr.mxu0 0.0
  %360 = vmatpush1.msra.mxu0 0.0
  %361 = vmatprep.subr.mxu0 0.0
  %362 = vmatpush1.msra.mxu0 0.0
  %363 = vmatprep.subr.mxu0 0.0
  %364 = vmatpush1.msra.mxu0 %v189
  %365 = vmatprep.subr.mxu0 0.0
  %366 = vmatpush1.msra.mxu0 %v188
  %367 = vmatprep.subr.mxu0 0.0
  %368 = vmatpush1.msra.mxu0 %v187
  %369 = vmatprep.subr.mxu0 0.0
  %370 = vmatpush1.msra.mxu0 %v186
  %371 = vmatprep.subr.mxu0 0.0
  %372 = vmatpush1.msra.mxu0 %v185
  %373 = vmatprep.subr.mxu0 0.0
  %374 = vmatpush1.msra.mxu0 %v184
  %375 = vmatprep.subr.mxu0 0.0
  %376 = vmatpush1.msra.mxu0 %v183
  %377 = vmatprep.subr.mxu0 0.0
  %378 = vmatpush1.msra.mxu0 %v182
  %379 = vmatprep.subr.mxu0 0.0
  %380 = vmatpush2.msra.mxu0 0.0
  %381 = vmatprep.subr.mxu0 0.0
  %382 = vmatpush2.msra.mxu0 0.0
  %383 = vmatprep.subr.mxu0 0.0
  %384 = vmatpush2.msra.mxu0 0.0
  %385 = vmatprep.subr.mxu0 0.0
  %386 = vmatpush2.msra.mxu0 0.0
  %387 = vmatprep.subr.mxu0 0.0
  %388 = vmatpush2.msra.mxu0 0.0
  %389 = vmatprep.subr.mxu0 0.0
  %390 = vmatpush2.msra.mxu0 0.0
  %391 = vmatprep.subr.mxu0 0.0
  %392 = vmatpush2.msra.mxu0 0.0
  %393 = vmatprep.subr.mxu0 0.0
  %394 = vmatpush2.msra.mxu0 0.0
  %395 = vmatprep.subr.mxu0 0.0
  %396 = vmatpush2.msra.mxu0 0.0
  %397 = vmatprep.subr.mxu0 0.0
  %398 = vmatpush2.msra.mxu0 0.0
  %399 = vmatprep.subr.mxu0 0.0
  %400 = vmatpush2.msra.mxu0 0.0
  %401 = vmatprep.subr.mxu0 0.0
  %402 = vmatpush2.msra.mxu0 0.0
  %403 = vmatprep.subr.mxu0 0.0
  %404 = vmatpush2.msra.mxu0 0.0
  %405 = vmatprep.subr.mxu0 0.0
  %406 = vmatpush2.msra.mxu0 0.0
  %407 = vmatprep.subr.mxu0 0.0
  %408 = vmatpush2.msra.mxu0 0.0
  %409 = vmatprep.subr.mxu0 0.0
  %410 = vmatpush2.msra.mxu0 0.0
  %411 = vmatprep.mubr.f32.mxu0 0.0
  %412 = vmatmul.mubr.f32.gmra.mxu0 %v345
  %v413 = vpop.f32.mrf.mxu0
  %v414 = vadd.f32 %v343, %v413
  %v415 = vpop.f32.mrf.mxu0
  %416 = vdwg.mxu0
  %v417 = vmul.f32 %v178, %v414
  %v418 = vmul.f32 %v181, %v270
  %v419 = vadd.f32 %v417, %v418
  %v420 = vsel %vm199, %v419, 0.0
  %421 = vadd.xlane.f32.xlu0 %v420
  %v422 = vpop.xlane.xlu0 %421
  %vm423 = vcmask 7168
  %424 = vst.msk [vmem:[%s2] sm:$0xff] %vm423, %v422
  // Predicated region
  $region10: #{vqc_forward.1} parent=0 // pred_check
    _
  $region11: #{vqc_forward.1} parent=0 // pred_check_branch
    %426 = sbr.rel (0) target = $region13
  $region12: #{vqc_forward.1} parent=0 // pred_region
    _
  $region13: #{vqc_forward.1} parent=0 // pred_fallthru
    _
  // Predicated region
  $region14: #{vqc_forward.1} parent=0 // pred_check
    _
  $region15: #{vqc_forward.1} parent=0 // pred_check_branch
    %428 = sbr.rel (0) target = $region17
  $region16: #{vqc_forward.1} parent=0 // pred_region
    _
  $region17: #{vqc_forward.1} parent=0 // pred_fallthru
    _

</llo_original>
